<compile_context>
chip_gen: v7x
topology: tpu7x:2x2x1
jax: 0.10.0
libtpu: 0.0.40
codegen_flags: <defaults>
</compile_context>

<pallas_src>
import jax
import jax.numpy as jnp
from jax.experimental import pallas as pl
from jax.experimental.pallas import tpu as pltpu

NUM_GAIT_PATTERNS = 6   # len(GaitPattern)
HIDDEN1 = 64
HIDDEN2 = 32

# Lane-dense (padded) widths used inside the kernel.
H1_PAD = 128
H2_PAD = 128
OUT_PAD = 128


def _round_up(n: int, m: int) -> int:
    return ((n + m - 1) // m) * m


def _mlp_kernel(x_ref, w1_ref, b1_ref, w2_ref, b2_ref, w3_ref, b3_ref, o_ref):
    # Layer 1: Linear(input_size, 64 [padded to 128]) + ReLU  (f32 accumulation on MXU)
    h1 = jnp.dot(x_ref[...], w1_ref[...], preferred_element_type=jnp.float32)
    h1 = jnp.maximum(h1 + b1_ref[...], 0.0)
    # Dropout(0.2): identity at inference time (no-op).
    # TODO(synk): training-mode stochastic dropout would need pltpu.prng_seed/prng_random_bits.
    # Layer 2: Linear(64, 32 [padded to 128]) + ReLU
    h1 = h1.astype(w2_ref.dtype)
    h2 = jnp.dot(h1, w2_ref[...], preferred_element_type=jnp.float32)
    h2 = jnp.maximum(h2 + b2_ref[...], 0.0)
    # Layer 3: Linear(32, 6 [padded to 128]) -> logits (no activation)
    h2 = h2.astype(w3_ref.dtype)
    y = jnp.dot(h2, w3_ref[...], preferred_element_type=jnp.float32)
    o_ref[...] = (y + b3_ref[...]).astype(o_ref.dtype)   # lane-dense (TILE_B, 128) store


def _pad_params(params, compute_dtype):
    """Zero-pad weights/biases to lane-dense 128-wide shapes; weights in compute_dtype, biases f32.

    Zero padding preserves semantics: padded hidden units see bias 0 -> ReLU(0)=0, and the
    corresponding padded rows of the next weight matrix are 0, so they contribute nothing.
    """
    w1, b1, w2, b2, w3, b3 = params
    in_size = w1.shape[0]
    w1p = jnp.zeros((in_size, H1_PAD), compute_dtype).at[:, :HIDDEN1].set(w1.astype(compute_dtype))
    b1p = jnp.zeros((1, H1_PAD), jnp.float32).at[:, :HIDDEN1].set(b1.astype(jnp.float32))
    w2p = jnp.zeros((H1_PAD, H2_PAD), compute_dtype).at[:HIDDEN1, :HIDDEN2].set(w2.astype(compute_dtype))
    b2p = jnp.zeros((1, H2_PAD), jnp.float32).at[:, :HIDDEN2].set(b2.astype(jnp.float32))
    w3p = jnp.zeros((H2_PAD, OUT_PAD), compute_dtype).at[:HIDDEN2, :NUM_GAIT_PATTERNS].set(w3.astype(compute_dtype))
    b3p = jnp.zeros((1, OUT_PAD), jnp.float32).at[:, :NUM_GAIT_PATTERNS].set(b3.astype(jnp.float32))
    return w1p, b1p, w2p, b2p, w3p, b3p


def gait_neural_net_forward(x, params, *, tile_b: int = 512, compute_dtype=jnp.bfloat16):
    """Fused forward pass. x: (B, input_size) float32. Returns (B, 6) float32 logits."""
    B, input_size = x.shape

    # Batch tile: multiple of 16 (bf16 sublane packing), capped at tile_b; pad B to a whole
    # number of tiles (padded rows are sliced off below, so no tail masking needed).
    tile = min(int(tile_b), _round_up(B, 16))
    tile = max(16, (tile // 16) * 16)
    b_pad = _round_up(B, tile)

    xp = x.astype(compute_dtype)
    if b_pad != B:
        xp = jnp.pad(xp, ((0, b_pad - B), (0, 0)))

    w1p, b1p, w2p, b2p, w3p, b3p = _pad_params(params, compute_dtype)

    grid = (b_pad // tile,)

    flops = 2 * b_pad * (input_size * H1_PAD + H1_PAD * H2_PAD + H2_PAD * OUT_PAD)
    bytes_accessed = (
        xp.size * xp.dtype.itemsize
        + sum(a.size * a.dtype.itemsize for a in (w1p, b1p, w2p, b2p, w3p, b3p))
        + b_pad * OUT_PAD * 4
    )
    cost = pl.CostEstimate(flops=flops, transcendentals=0, bytes_accessed=bytes_accessed)

    out_padded = pl.pallas_call(
        _mlp_kernel,
        out_shape=jax.ShapeDtypeStruct((b_pad, OUT_PAD), jnp.float32),
        grid=grid,
        in_specs=[
            # x tile: streamed (double-buffered) over the batch grid axis.
            pl.BlockSpec((tile, input_size), lambda i: (i, 0)),
            # Weights / biases: constant index_map -> VMEM-resident, DMA'd once.
            pl.BlockSpec((input_size, H1_PAD), lambda i: (0, 0)),
            pl.BlockSpec((1, H1_PAD), lambda i: (0, 0)),
            pl.BlockSpec((H1_PAD, H2_PAD), lambda i: (0, 0)),
            pl.BlockSpec((1, H2_PAD), lambda i: (0, 0)),
            pl.BlockSpec((H2_PAD, OUT_PAD), lambda i: (0, 0)),
            pl.BlockSpec((1, OUT_PAD), lambda i: (0, 0)),
        ],
        out_specs=pl.BlockSpec((tile, OUT_PAD), lambda i: (i, 0)),
        compiler_params=pltpu.CompilerParams(
            dimension_semantics=("parallel",),      # shard batch tiles across TCs (v7x)
            vmem_limit_bytes=48 * 1024 * 1024,      # explicit budget; safe on v7x's 64 MiB VMEM
        ),
        cost_estimate=cost,
    )(xp, w1p, b1p, w2p, b2p, w3p, b3p)

    return out_padded[:B, :NUM_GAIT_PATTERNS]


def init_params(input_size: int, key):
    """Deterministic parameter init mirroring the PyTorch module's layer shapes."""
    k1, k2, k3, k4, k5, k6 = jax.random.split(key, 6)

    def linear_init(kw, kb, fan_in, fan_out):
        bound = 1.0 / jnp.sqrt(jnp.float32(fan_in))
        w = jax.random.uniform(kw, (fan_in, fan_out), jnp.float32, -bound, bound)  # (in, out)
        b = jax.random.uniform(kb, (1, fan_out), jnp.float32, -bound, bound)
        return w, b

    w1, b1 = linear_init(k1, k2, input_size, HIDDEN1)
    w2, b2 = linear_init(k3, k4, HIDDEN1, HIDDEN2)
    w3, b3 = linear_init(k5, k6, HIDDEN2, NUM_GAIT_PATTERNS)
    return (w1, b1, w2, b2, w3, b3)


def reference_forward(x, params, compute_dtype=jnp.bfloat16):
    """Pure-JAX reference with the same precision strategy (bf16 matmuls, f32 accum/bias)."""
    w1, b1, w2, b2, w3, b3 = params
    cd = compute_dtype
    h = jnp.dot(x.astype(cd), w1.astype(cd), preferred_element_type=jnp.float32)
    h = jnp.maximum(h + b1, 0.0).astype(cd)
    h = jnp.dot(h, w2.astype(cd), preferred_element_type=jnp.float32)
    h = jnp.maximum(h + b2, 0.0).astype(cd)
    y = jnp.dot(h, w3.astype(cd), preferred_element_type=jnp.float32)
    return y + b3


if __name__ == "__main__":
    key = jax.random.PRNGKey(0)
    k_params, k_x1, k_x2 = jax.random.split(key, 3)

    input_size = 32
    params = init_params(input_size, k_params)

    # Small batch (exercises batch padding 8 -> 16, single grid step).
    x_small = jax.random.normal(k_x1, (8, input_size), dtype=jnp.float32)
    out_small = jax.block_until_ready(gait_neural_net_forward(x_small, params))
    ref_small = reference_forward(x_small, params)
    assert out_small.shape == (8, NUM_GAIT_PATTERNS), out_small.shape
    assert jnp.allclose(out_small, ref_small, atol=2e-2, rtol=2e-2), "small-batch mismatch"

    # Ragged batch with a small tile to exercise the multi-step pipelined grid (40 -> 48, 3 tiles).
    x_big = jax.random.normal(k_x2, (40, input_size), dtype=jnp.float32)
    out_big = jax.block_until_ready(gait_neural_net_forward(x_big, params, tile_b=16))
    ref_big = reference_forward(x_big, params)
    assert out_big.shape == (40, NUM_GAIT_PATTERNS), out_big.shape
    assert jnp.allclose(out_big, ref_big, atol=2e-2, rtol=2e-2), "multi-tile mismatch"

    print("KERNEL_OK")
</pallas_src>

<mosaic_0001>
module attributes {stable_mosaic.version = 11 : i64} {
  func.func @_mlp_kernel(%arg0: i32, %arg1: memref<16x32xbf16, #tpu.memory_space<vmem>>, %arg2: memref<32x128xbf16, #tpu.memory_space<vmem>>, %arg3: memref<1x128xf32, #tpu.memory_space<vmem>>, %arg4: memref<128x128xbf16, #tpu.memory_space<vmem>>, %arg5: memref<1x128xf32, #tpu.memory_space<vmem>>, %arg6: memref<128x128xbf16, #tpu.memory_space<vmem>>, %arg7: memref<1x128xf32, #tpu.memory_space<vmem>>, %arg8: memref<16x128xf32, #tpu.memory_space<vmem>>) attributes {dimension_semantics = [#tpu.dimension_semantics<parallel>], iteration_bounds = array<i64: 1>, scalar_prefetch = 0 : i64, scratch_operands = 0 : i64, tpu.core_type = #tpu.core_type<tc>, window_params = [{transform_indices = @transform_0, window_bounds = array<i64: 16, 32>}, {pipeline_mode = #tpu.pipeline_mode<synchronous>, transform_indices = @transform_1, window_bounds = array<i64: 32, 128>}, {pipeline_mode = #tpu.pipeline_mode<synchronous>, transform_indices = @transform_2, window_bounds = array<i64: 1, 128>}, {pipeline_mode = #tpu.pipeline_mode<synchronous>, transform_indices = @transform_3, window_bounds = array<i64: 128, 128>}, {pipeline_mode = #tpu.pipeline_mode<synchronous>, transform_indices = @transform_4, window_bounds = array<i64: 1, 128>}, {pipeline_mode = #tpu.pipeline_mode<synchronous>, transform_indices = @transform_5, window_bounds = array<i64: 128, 128>}, {pipeline_mode = #tpu.pipeline_mode<synchronous>, transform_indices = @transform_6, window_bounds = array<i64: 1, 128>}, {transform_indices = @transform_7, window_bounds = array<i64: 16, 128>}]} {
    %c0 = arith.constant 0 : index
    %c0_0 = arith.constant 0 : index
    %0 = vector.load %arg1[%c0, %c0_0] : memref<16x32xbf16, #tpu.memory_space<vmem>>, vector<16x32xbf16>
    %c0_1 = arith.constant 0 : index
    %c0_2 = arith.constant 0 : index
    %1 = vector.load %arg2[%c0_1, %c0_2] : memref<32x128xbf16, #tpu.memory_space<vmem>>, vector<32x128xbf16>
    %cst = arith.constant dense<0.000000e+00> : vector<16x128xf32>
    %2 = tpu.matmul %0, %1, %cst {dimension_numbers = #tpu.dot_dimension_numbers<[1], [0], [0], [1], [0, 0, 1, 1], [], []>} : vector<16x32xbf16>, vector<32x128xbf16>, vector<16x128xf32> -> vector<16x128xf32>
    %c0_3 = arith.constant 0 : index
    %c0_4 = arith.constant 0 : index
    %3 = vector.load %arg3[%c0_3, %c0_4] : memref<1x128xf32, #tpu.memory_space<vmem>>, vector<1x128xf32>
    %4 = vector.broadcast %3 : vector<1x128xf32> to vector<16x128xf32>
    %5 = arith.addf %2, %4 : vector<16x128xf32>
    %cst_5 = arith.constant 0.000000e+00 : f32
    %6 = vector.broadcast %cst_5 : f32 to vector<16x128xf32>
    %7 = arith.maximumf %5, %6 : vector<16x128xf32>
    %8 = arith.truncf %7 : vector<16x128xf32> to vector<16x128xbf16>
    %c0_6 = arith.constant 0 : index
    %c0_7 = arith.constant 0 : index
    %9 = vector.load %arg4[%c0_6, %c0_7] : memref<128x128xbf16, #tpu.memory_space<vmem>>, vector<128x128xbf16>
    %cst_8 = arith.constant dense<0.000000e+00> : vector<16x128xf32>
    %10 = tpu.matmul %8, %9, %cst_8 {dimension_numbers = #tpu.dot_dimension_numbers<[1], [0], [0], [1], [0, 0, 1, 1], [], []>} : vector<16x128xbf16>, vector<128x128xbf16>, vector<16x128xf32> -> vector<16x128xf32>
    %c0_9 = arith.constant 0 : index
    %c0_10 = arith.constant 0 : index
    %11 = vector.load %arg5[%c0_9, %c0_10] : memref<1x128xf32, #tpu.memory_space<vmem>>, vector<1x128xf32>
    %12 = vector.broadcast %11 : vector<1x128xf32> to vector<16x128xf32>
    %13 = arith.addf %10, %12 : vector<16x128xf32>
    %cst_11 = arith.constant 0.000000e+00 : f32
    %14 = vector.broadcast %cst_11 : f32 to vector<16x128xf32>
    %15 = arith.maximumf %13, %14 : vector<16x128xf32>
    %16 = arith.truncf %15 : vector<16x128xf32> to vector<16x128xbf16>
    %c0_12 = arith.constant 0 : index
    %c0_13 = arith.constant 0 : index
    %17 = vector.load %arg6[%c0_12, %c0_13] : memref<128x128xbf16, #tpu.memory_space<vmem>>, vector<128x128xbf16>
    %cst_14 = arith.constant dense<0.000000e+00> : vector<16x128xf32>
    %18 = tpu.matmul %16, %17, %cst_14 {dimension_numbers = #tpu.dot_dimension_numbers<[1], [0], [0], [1], [0, 0, 1, 1], [], []>} : vector<16x128xbf16>, vector<128x128xbf16>, vector<16x128xf32> -> vector<16x128xf32>
    %c0_15 = arith.constant 0 : index
    %c0_16 = arith.constant 0 : index
    %19 = vector.load %arg7[%c0_15, %c0_16] : memref<1x128xf32, #tpu.memory_space<vmem>>, vector<1x128xf32>
    %20 = vector.broadcast %19 : vector<1x128xf32> to vector<16x128xf32>
    %21 = arith.addf %18, %20 : vector<16x128xf32>
    %c0_17 = arith.constant 0 : index
    %c0_18 = arith.constant 0 : index
    %22 = vector.load %arg8[%c0_17, %c0_18] : memref<16x128xf32, #tpu.memory_space<vmem>>, vector<16x128xf32>
    tpu.vector_store %arg8[%c0_17, %c0_18], %21 {strides = array<i32>} : memref<16x128xf32, #tpu.memory_space<vmem>>, vector<16x128xf32>,
    return
  }
  func.func @transform_0(%arg0: i32) -> (i32, i32) {
    %c0_i32 = arith.constant 0 : i32
    %c0_i32_0 = arith.constant 0 : i32
    return %arg0, %c0_i32 : i32, i32
  }
  func.func @transform_1(%arg0: i32) -> (i32, i32) {
    %c0_i32 = arith.constant 0 : i32
    %c0_i32_0 = arith.constant 0 : i32
    %c0_i32_1 = arith.constant 0 : i32
    return %c0_i32, %c0_i32_0 : i32, i32
  }
  func.func @transform_2(%arg0: i32) -> (i32, i32) {
    %c0_i32 = arith.constant 0 : i32
    %c0_i32_0 = arith.constant 0 : i32
    %c0_i32_1 = arith.constant 0 : i32
    return %c0_i32, %c0_i32_0 : i32, i32
  }
  func.func @transform_3(%arg0: i32) -> (i32, i32) {
    %c0_i32 = arith.constant 0 : i32
    %c0_i32_0 = arith.constant 0 : i32
    %c0_i32_1 = arith.constant 0 : i32
    return %c0_i32, %c0_i32_0 : i32, i32
  }
  func.func @transform_4(%arg0: i32) -> (i32, i32) {
    %c0_i32 = arith.constant 0 : i32
    %c0_i32_0 = arith.constant 0 : i32
    %c0_i32_1 = arith.constant 0 : i32
    return %c0_i32, %c0_i32_0 : i32, i32
  }
  func.func @transform_5(%arg0: i32) -> (i32, i32) {
    %c0_i32 = arith.constant 0 : i32
    %c0_i32_0 = arith.constant 0 : i32
    %c0_i32_1 = arith.constant 0 : i32
    return %c0_i32, %c0_i32_0 : i32, i32
  }
  func.func @transform_6(%arg0: i32) -> (i32, i32) {
    %c0_i32 = arith.constant 0 : i32
    %c0_i32_0 = arith.constant 0 : i32
    %c0_i32_1 = arith.constant 0 : i32
    return %c0_i32, %c0_i32_0 : i32, i32
  }
  func.func @transform_7(%arg0: i32) -> (i32, i32) {
    %c0_i32 = arith.constant 0 : i32
    %c0_i32_0 = arith.constant 0 : i32
    return %arg0, %c0_i32 : i32, i32
  }
}

</mosaic_0001>

<llo_original>
// kernel: tpu_custom_call.1
$region0: #{tpu_custom_call.1}
  #allocation0 [shape = 'u32[]', space=smem, size = 0x4, offset = 0x4, fixed_abs, tag = 'smem constant byte address 0x4 - core index']
  #allocation1 [shape = 'u32[144,128]{1,0:T(1,128)}', space=vmem, size = 0x12000, scoped, tag = 'internal scratch']
  %s0 = inlined_call_operand.hbm [shape: bf16[16,32], index: 0, kind: input, shape index: {}]
  %s1 = inlined_call_operand.hbm [shape: bf16[32,128], index: 1, kind: input, shape index: {}]
  %s2 = inlined_call_operand.vmem [shape: f32[1,128], index: 2, kind: input, shape index: {}]
  %s3 = inlined_call_operand.hbm [shape: bf16[128,128], index: 3, kind: input, shape index: {}]
  %s4 = inlined_call_operand.vmem [shape: f32[1,128], index: 4, kind: input, shape index: {}]
  %s5 = inlined_call_operand.hbm [shape: bf16[128,128], index: 5, kind: input, shape index: {}]
  %s6 = inlined_call_operand.vmem [shape: f32[1,128], index: 6, kind: input, shape index: {}]
  %s7 = inlined_call_operand.hbm [shape: f32[16,128], index: 7, kind: output, shape index: {}]
  %s8 = sld [smem:[#allocation0]]
  $region54: #{tpu_custom_call.1} parent=0
    _
  %s10 = ssub.s32 1, %s8
  %s11 = scalar_select 0, %s10, %s8
  $region1: #{tpu_custom_call.1} parent=0
    #allocation2 [shape = 'u8[4096]{0}', space=vmem, size = 0x1000, scoped, tag = 'input window, operand 0, single buffered']
    #allocation3 [shape = 's32[1]{0}', space=sflag, size = 0x4, scoped, tag = 'scoped memory for tpu_custom_call.1']
    #allocation4 [shape = 's32[1]{0}', space=sflag, size = 0x4, scoped, tag = 'scoped memory for tpu_custom_call.1']
    #allocation5 [shape = 'u8[8192]{0}', space=vmem, size = 0x2000, scoped, tag = 'input window, operand 1, single buffered']
    #allocation6 [shape = 's32[1]{0}', space=sflag, size = 0x4, scoped, tag = 'scoped memory for tpu_custom_call.1']
    #allocation7 [shape = 'u8[32768]{0}', space=vmem, size = 0x8000, scoped, tag = 'input window, operand 3, single buffered']
    #allocation8 [shape = 'u8[32768]{0}', space=vmem, size = 0x8000, scoped, tag = 'input window, operand 5, single buffered']
    #allocation9 [shape = 's32[1]{0}', space=sflag, size = 0x4, scoped, tag = 'scoped memory for tpu_custom_call.1']
    #allocation10 [shape = 'u8[8192]{0}', space=vmem, size = 0x2000, scoped, tag = 'output window, operand 0, single buffered']
    %12 = vsyncpa [#allocation3], 0
    %13 = vsyncpa [#allocation6], 0
    %14 = vsyncpa [#allocation9], 0
    %15 = vsyncpa [#allocation4], 0
    // Predicated region
    $region2: #{tpu_custom_call.1} parent=1 // pred_check
      _
    $region3: #{tpu_custom_call.1} parent=1 // pred_check_branch
      %17 = sbr.rel (0) target = $region5
    $region4: #{tpu_custom_call.1} parent=1 // pred_region
      %s19 = ssub.s32 128, 128
      %20 = vsyncadd [#allocation3], %s19
      %s21 = sshll.u32 [#allocation2], 4
      %s22 = int_to_ptr.vmem [resolvable:$true] %s21
      %27 = dma.hbm_to_vmem [thread:$0]  %s0, 128, %s22, [#allocation3], 64, 64, 4
    $region5: #{tpu_custom_call.1} parent=1 // pred_fallthru
      _
    // Predicated region
    $region6: #{tpu_custom_call.1} parent=1 // pred_check
      _
    $region7: #{tpu_custom_call.1} parent=1 // pred_check_branch
      %29 = sbr.rel (0) target = $region9
    $region8: #{tpu_custom_call.1} parent=1 // pred_region
      %s31 = ssub.s32 256, 256
      %32 = vsyncadd [#allocation6], %s31
      %s33 = sshll.u32 [#allocation5], 4
      %s34 = int_to_ptr.vmem [resolvable:$true] %s33
      %39 = dma.hbm_to_vmem [thread:$0]  %s1, 256, %s34, [#allocation6], 64, 64, 4
    $region9: #{tpu_custom_call.1} parent=1 // pred_fallthru
      _
    // Predicated region
    $region10: #{tpu_custom_call.1} parent=1 // pred_check
      _
    $region11: #{tpu_custom_call.1} parent=1 // pred_check_branch
      %41 = sbr.rel (0) target = $region13
    $region12: #{tpu_custom_call.1} parent=1 // pred_region
      _
    $region13: #{tpu_custom_call.1} parent=1 // pred_fallthru
      _
    // Predicated region
    $region14: #{tpu_custom_call.1} parent=1 // pred_check
      _
    $region15: #{tpu_custom_call.1} parent=1 // pred_check_branch
      %43 = sbr.rel (0) target = $region17
    $region16: #{tpu_custom_call.1} parent=1 // pred_region
      %s45 = ssub.s32 1024, 1024
      %46 = vsyncadd [#allocation6], %s45
      %s47 = sshll.u32 [#allocation7], 4
      %s48 = int_to_ptr.vmem [resolvable:$true] %s47
      %53 = dma.hbm_to_vmem [thread:$0]  %s3, 1024, %s48, [#allocation6], 64, 64, 4
    $region17: #{tpu_custom_call.1} parent=1 // pred_fallthru
      _
    // Predicated region
    $region18: #{tpu_custom_call.1} parent=1 // pred_check
      _
    $region19: #{tpu_custom_call.1} parent=1 // pred_check_branch
      %55 = sbr.rel (0) target = $region21
    $region20: #{tpu_custom_call.1} parent=1 // pred_region
      _
    $region21: #{tpu_custom_call.1} parent=1 // pred_fallthru
      _
    // Predicated region
    $region22: #{tpu_custom_call.1} parent=1 // pred_check
      _
    $region23: #{tpu_custom_call.1} parent=1 // pred_check_branch
      %57 = sbr.rel (0) target = $region25
    $region24: #{tpu_custom_call.1} parent=1 // pred_region
      %s59 = ssub.s32 1024, 1024
      %60 = vsyncadd [#allocation9], %s59
      %s61 = sshll.u32 [#allocation8], 4
      %s62 = int_to_ptr.vmem [resolvable:$true] %s61
      %67 = dma.hbm_to_vmem [thread:$0]  %s5, 1024, %s62, [#allocation9], 64, 64, 4
    $region25: #{tpu_custom_call.1} parent=1 // pred_fallthru
      _
    // Predicated region
    $region26: #{tpu_custom_call.1} parent=1 // pred_check
      _
    $region27: #{tpu_custom_call.1} parent=1 // pred_check_branch
      %69 = sbr.rel (0) target = $region29
    $region28: #{tpu_custom_call.1} parent=1 // pred_region
      _
    $region29: #{tpu_custom_call.1} parent=1 // pred_fallthru
      _
    // Predicated region
    $region30: #{tpu_custom_call.1} parent=1 // pred_check
      _
    $region31: #{tpu_custom_call.1} parent=1 // pred_check_branch
      %71 = sbr.rel (0) target = $region33
    $region32: #{tpu_custom_call.1} parent=1 // pred_region
      %72 = dma.done [#allocation3], 128
    $region33: #{tpu_custom_call.1} parent=1 // pred_fallthru
      _
    // Predicated region
    $region34: #{tpu_custom_call.1} parent=1 // pred_check
      _
    $region35: #{tpu_custom_call.1} parent=1 // pred_check_branch
      %74 = sbr.rel (0) target = $region37
    $region36: #{tpu_custom_call.1} parent=1 // pred_region
      %75 = dma.done [#allocation6], 256
    $region37: #{tpu_custom_call.1} parent=1 // pred_fallthru
      _
    // Predicated region
    $region38: #{tpu_custom_call.1} parent=1 // pred_check
      _
    $region39: #{tpu_custom_call.1} parent=1 // pred_check_branch
      %77 = sbr.rel (0) target = $region41
    $region40: #{tpu_custom_call.1} parent=1 // pred_region
      %78 = dma.done [#allocation6], 1024
    $region41: #{tpu_custom_call.1} parent=1 // pred_fallthru
      _
    // Predicated region
    $region42: #{tpu_custom_call.1} parent=1 // pred_check
      _
    $region43: #{tpu_custom_call.1} parent=1 // pred_check_branch
      %80 = sbr.rel (0) target = $region45
    $region44: #{tpu_custom_call.1} parent=1 // pred_region
      %81 = dma.done [#allocation9], 1024
    $region45: #{tpu_custom_call.1} parent=1 // pred_fallthru
      _
    %v83 = vld [vmem:[#allocation2] sm:$0xf]
    %v84 = vld [vmem:[#allocation2 + $0x4] sm:$0xf]
    %v85 = vld [vmem:[#allocation5] sm:$0xf]
    %v86 = vld [vmem:[#allocation5 + $0x4] sm:$0xf]
    %v87 = vld [vmem:[#allocation5 + $0x8] sm:$0xf]
    %v88 = vld [vmem:[#allocation5 + $0xc] sm:$0xf]
    %v89 = vld [vmem:[%s2] sm:$0x1]
    %v91 = vlaneseq
    %v92 = vshrl.u32 %v91, 7
    %v93 = vsub.s32 0, %v92
    %v94 = vrot.slane %v89, %v93
    %v98 = vunpack.c.l.b16 %v83
    %v99 = vunpack.c.l.b16 %v84
    %v100 = vpack.c.b16 %v99, %v98
    %v105 = vunpack.c.l.b16 %v85
    %v106 = vunpack.c.l.b16 %v86
    %v107 = vunpack.c.l.b16 %v87
    %v108 = vunpack.c.l.b16 %v88
    %v109 = vpack.c.b16 %v106, %v105
    %v110 = vpack.c.b16 %v108, %v107
    %vm113 = vcmask 261120
    %v115 = vsel %vm113, %v100, 0
    %117 = vmatprep.subr.bf16.mxu0 0
    %118 = vmatpush1.bf16.msra.mxu0 %v109
    %119 = vmatprep.subr.bf16.mxu0 0
    %120 = vmatpush1.bf16.msra.mxu0 %v110
    %121 = vmatprep.subr.bf16.mxu0 0
    %122 = vmatpush1.bf16.msra.mxu0 0
    %123 = vmatprep.subr.bf16.mxu0 0
    %124 = vmatpush1.bf16.msra.mxu0 0
    %125 = vmatprep.subr.bf16.mxu0 0
    %126 = vmatpush1.bf16.msra.mxu0 0
    %127 = vmatprep.subr.bf16.mxu0 0
    %128 = vmatpush1.bf16.msra.mxu0 0
    %129 = vmatprep.subr.bf16.mxu0 0
    %130 = vmatpush1.bf16.msra.mxu0 0
    %131 = vmatprep.subr.bf16.mxu0 0
    %132 = vmatpush1.bf16.msra.mxu0 0
    %133 = vmatprep.subr.bf16.mxu0 0
    %134 = vmatpush1.bf16.msra.mxu0 0
    %135 = vmatprep.subr.bf16.mxu0 0
    %136 = vmatpush1.bf16.msra.mxu0 0
    %137 = vmatprep.subr.bf16.mxu0 0
    %138 = vmatpush1.bf16.msra.mxu0 0
    %139 = vmatprep.subr.bf16.mxu0 0
    %140 = vmatpush1.bf16.msra.mxu0 0
    %141 = vmatprep.subr.bf16.mxu0 0
    %142 = vmatpush1.bf16.msra.mxu0 0
    %143 = vmatprep.subr.bf16.mxu0 0
    %144 = vmatpush1.bf16.msra.mxu0 0
    %145 = vmatprep.subr.bf16.mxu0 0
    %146 = vmatpush1.bf16.msra.mxu0 0
    %147 = vmatprep.subr.bf16.mxu0 0
    %148 = vmatpush1.bf16.msra.mxu0 0
    %149 = vmatprep.mubr.bf16.mxu0 0
    %150 = vmatmul.mubr.bf16.gmra.mrb[0].mxu0 %v115
    %v151 = vpop.f32.mrb[0].mxu0
    %v152 = vadd.f32 %v94, %v151
    %v153 = vpop.f32.mrb[0].mxu0
    %v154 = vpop.f32.mrb[0].mxu0
    %v155 = vadd.f32 %v94, %v154
    %v156 = vpop.f32.mrb[0].mxu0
    %157 = vdwg.mxu0
    %v158 = vmax.f32 %v152, 0.0
    %v159 = vmax.f32 %v155, 0.0
    %v160 = vpack.c.bf16 %v159, %v158
    %v161 = vld [vmem:[#allocation7] sm:$0xf]
    %v162 = vld [vmem:[#allocation7 + $0x4] sm:$0xf]
    %v163 = vld [vmem:[#allocation7 + $0x8] sm:$0xf]
    %v164 = vld [vmem:[#allocation7 + $0xc] sm:$0xf]
    %v165 = vld [vmem:[#allocation7 + $0x10] sm:$0xf]
    %v166 = vld [vmem:[#allocation7 + $0x14] sm:$0xf]
    %v167 = vld [vmem:[#allocation7 + $0x18] sm:$0xf]
    %v168 = vld [vmem:[#allocation7 + $0x1c] sm:$0xf]
    %v169 = vld [vmem:[#allocation7 + $0x20] sm:$0xf]
    %v170 = vld [vmem:[#allocation7 + $0x24] sm:$0xf]
    %v171 = vld [vmem:[#allocation7 + $0x28] sm:$0xf]
    %v172 = vld [vmem:[#allocation7 + $0x2c] sm:$0xf]
    %v173 = vld [vmem:[#allocation7 + $0x30] sm:$0xf]
    %v174 = vld [vmem:[#allocation7 + $0x34] sm:$0xf]
    %v175 = vld [vmem:[#allocation7 + $0x38] sm:$0xf]
    %v176 = vld [vmem:[#allocation7 + $0x3c] sm:$0xf]
    %v177 = vld [vmem:[%s4] sm:$0x1]
    %v179 = vlaneseq
    %v180 = vshrl.u32 %v179, 7
    %v181 = vsub.s32 0, %v180
    %v182 = vrot.slane %v177, %v181
    %v200 = vunpack.c.l.b16 %v161
    %v201 = vunpack.c.l.b16 %v162
    %v202 = vunpack.c.l.b16 %v163
    %v203 = vunpack.c.l.b16 %v164
    %v204 = vunpack.c.l.b16 %v165
    %v205 = vunpack.c.l.b16 %v166
    %v206 = vunpack.c.l.b16 %v167
    %v207 = vunpack.c.l.b16 %v168
    %v208 = vunpack.c.l.b16 %v169
    %v209 = vunpack.c.l.b16 %v170
    %v210 = vunpack.c.l.b16 %v171
    %v211 = vunpack.c.l.b16 %v172
    %v212 = vunpack.c.l.b16 %v173
    %v213 = vunpack.c.l.b16 %v174
    %v214 = vunpack.c.l.b16 %v175
    %v215 = vunpack.c.l.b16 %v176
    %v216 = vpack.c.b16 %v201, %v200
    %v217 = vpack.c.b16 %v203, %v202
    %v218 = vpack.c.b16 %v205, %v204
    %v219 = vpack.c.b16 %v207, %v206
    %v220 = vpack.c.b16 %v209, %v208
    %v221 = vpack.c.b16 %v211, %v210
    %v222 = vpack.c.b16 %v213, %v212
    %v223 = vpack.c.b16 %v215, %v214
    %232 = vmatprep.subr.bf16.mxu0 0
    %233 = vmatpush1.bf16.msra.mxu0 %v216
    %234 = vmatprep.subr.bf16.mxu0 0
    %235 = vmatpush1.bf16.msra.mxu0 %v217
    %236 = vmatprep.subr.bf16.mxu0 0
    %237 = vmatpush1.bf16.msra.mxu0 %v218
    %238 = vmatprep.subr.bf16.mxu0 0
    %239 = vmatpush1.bf16.msra.mxu0 %v219
    %240 = vmatprep.subr.bf16.mxu0 0
    %241 = vmatpush1.bf16.msra.mxu0 %v220
    %242 = vmatprep.subr.bf16.mxu0 0
    %243 = vmatpush1.bf16.msra.mxu0 %v221
    %244 = vmatprep.subr.bf16.mxu0 0
    %245 = vmatpush1.bf16.msra.mxu0 %v222
    %246 = vmatprep.subr.bf16.mxu0 0
    %247 = vmatpush1.bf16.msra.mxu0 %v223
    %248 = vmatprep.subr.bf16.mxu0 0
    %249 = vmatpush1.bf16.msra.mxu0 0
    %250 = vmatprep.subr.bf16.mxu0 0
    %251 = vmatpush1.bf16.msra.mxu0 0
    %252 = vmatprep.subr.bf16.mxu0 0
    %253 = vmatpush1.bf16.msra.mxu0 0
    %254 = vmatprep.subr.bf16.mxu0 0
    %255 = vmatpush1.bf16.msra.mxu0 0
    %256 = vmatprep.subr.bf16.mxu0 0
    %257 = vmatpush1.bf16.msra.mxu0 0
    %258 = vmatprep.subr.bf16.mxu0 0
    %259 = vmatpush1.bf16.msra.mxu0 0
    %260 = vmatprep.subr.bf16.mxu0 0
    %261 = vmatpush1.bf16.msra.mxu0 0
    %262 = vmatprep.subr.bf16.mxu0 0
    %263 = vmatpush1.bf16.msra.mxu0 0
    %264 = vmatprep.mubr.bf16.mxu0 0
    %265 = vmatmul.mubr.bf16.gmra.mrb[0].mxu0 %v160
    %v266 = vpop.f32.mrb[0].mxu0
    %v267 = vadd.f32 %v182, %v266
    %v268 = vpop.f32.mrb[0].mxu0
    %v269 = vpop.f32.mrb[0].mxu0
    %v270 = vadd.f32 %v182, %v269
    %v271 = vpop.f32.mrb[0].mxu0
    %272 = vdwg.mxu0
    %v273 = vmax.f32 %v267, 0.0
    %v274 = vmax.f32 %v270, 0.0
    %v275 = vpack.c.bf16 %v274, %v273
    %v276 = vld [vmem:[#allocation8] sm:$0xf]
    %v277 = vld [vmem:[#allocation8 + $0x4] sm:$0xf]
    %v278 = vld [vmem:[#allocation8 + $0x8] sm:$0xf]
    %v279 = vld [vmem:[#allocation8 + $0xc] sm:$0xf]
    %v280 = vld [vmem:[#allocation8 + $0x10] sm:$0xf]
    %v281 = vld [vmem:[#allocation8 + $0x14] sm:$0xf]
    %v282 = vld [vmem:[#allocation8 + $0x18] sm:$0xf]
    %v283 = vld [vmem:[#allocation8 + $0x1c] sm:$0xf]
    %v284 = vld [vmem:[#allocation8 + $0x20] sm:$0xf]
    %v285 = vld [vmem:[#allocation8 + $0x24] sm:$0xf]
    %v286 = vld [vmem:[#allocation8 + $0x28] sm:$0xf]
    %v287 = vld [vmem:[#allocation8 + $0x2c] sm:$0xf]
    %v288 = vld [vmem:[#allocation8 + $0x30] sm:$0xf]
    %v289 = vld [vmem:[#allocation8 + $0x34] sm:$0xf]
    %v290 = vld [vmem:[#allocation8 + $0x38] sm:$0xf]
    %v291 = vld [vmem:[#allocation8 + $0x3c] sm:$0xf]
    %v292 = vld [vmem:[%s6] sm:$0x1]
    %v294 = vlaneseq
    %v295 = vshrl.u32 %v294, 7
    %v296 = vsub.s32 0, %v295
    %v297 = vrot.slane %v292, %v296
    %v315 = vunpack.c.l.b16 %v276
    %v316 = vunpack.c.l.b16 %v277
    %v317 = vunpack.c.l.b16 %v278
    %v318 = vunpack.c.l.b16 %v279
    %v319 = vunpack.c.l.b16 %v280
    %v320 = vunpack.c.l.b16 %v281
    %v321 = vunpack.c.l.b16 %v282
    %v322 = vunpack.c.l.b16 %v283
    %v323 = vunpack.c.l.b16 %v284
    %v324 = vunpack.c.l.b16 %v285
    %v325 = vunpack.c.l.b16 %v286
    %v326 = vunpack.c.l.b16 %v287
    %v327 = vunpack.c.l.b16 %v288
    %v328 = vunpack.c.l.b16 %v289
    %v329 = vunpack.c.l.b16 %v290
    %v330 = vunpack.c.l.b16 %v291
    %v331 = vpack.c.b16 %v316, %v315
    %v332 = vpack.c.b16 %v318, %v317
    %v333 = vpack.c.b16 %v320, %v319
    %v334 = vpack.c.b16 %v322, %v321
    %v335 = vpack.c.b16 %v324, %v323
    %v336 = vpack.c.b16 %v326, %v325
    %v337 = vpack.c.b16 %v328, %v327
    %v338 = vpack.c.b16 %v330, %v329
    %347 = vmatprep.subr.bf16.mxu0 0
    %348 = vmatpush1.bf16.msra.mxu0 %v331
    %349 = vmatprep.subr.bf16.mxu0 0
    %350 = vmatpush1.bf16.msra.mxu0 %v332
    %351 = vmatprep.subr.bf16.mxu0 0
    %352 = vmatpush1.bf16.msra.mxu0 %v333
    %353 = vmatprep.subr.bf16.mxu0 0
    %354 = vmatpush1.bf16.msra.mxu0 %v334
    %355 = vmatprep.subr.bf16.mxu0 0
    %356 = vmatpush1.bf16.msra.mxu0 %v335
    %357 = vmatprep.subr.bf16.mxu0 0
    %358 = vmatpush1.bf16.msra.mxu0 %v336
    %359 = vmatprep.subr.bf16.mxu0 0
    %360 = vmatpush1.bf16.msra.mxu0 %v337
    %361 = vmatprep.subr.bf16.mxu0 0
    %362 = vmatpush1.bf16.msra.mxu0 %v338
    %363 = vmatprep.subr.bf16.mxu0 0
    %364 = vmatpush1.bf16.msra.mxu0 0
    %365 = vmatprep.subr.bf16.mxu0 0
    %366 = vmatpush1.bf16.msra.mxu0 0
    %367 = vmatprep.subr.bf16.mxu0 0
    %368 = vmatpush1.bf16.msra.mxu0 0
    %369 = vmatprep.subr.bf16.mxu0 0
    %370 = vmatpush1.bf16.msra.mxu0 0
    %371 = vmatprep.subr.bf16.mxu0 0
    %372 = vmatpush1.bf16.msra.mxu0 0
    %373 = vmatprep.subr.bf16.mxu0 0
    %374 = vmatpush1.bf16.msra.mxu0 0
    %375 = vmatprep.subr.bf16.mxu0 0
    %376 = vmatpush1.bf16.msra.mxu0 0
    %377 = vmatprep.subr.bf16.mxu0 0
    %378 = vmatpush1.bf16.msra.mxu0 0
    %379 = vmatprep.mubr.bf16.mxu0 0
    %380 = vmatmul.mubr.bf16.gmra.mrb[0].mxu0 %v275
    %v381 = vpop.f32.mrb[0].mxu0
    %v382 = vadd.f32 %v297, %v381
    %v383 = vpop.f32.mrb[0].mxu0
    %v384 = vpop.f32.mrb[0].mxu0
    %v385 = vadd.f32 %v297, %v384
    %v386 = vpop.f32.mrb[0].mxu0
    %387 = vdwg.mxu0
    %388 = vst [vmem:[#allocation10] sm:$0xff] %v382
    %389 = vst [vmem:[#allocation10 + $0x8] sm:$0xff] %v385
    // Predicated region
    $region46: #{tpu_custom_call.1} parent=1 // pred_check
      _
    $region47: #{tpu_custom_call.1} parent=1 // pred_check_branch
      %391 = sbr.rel (0) target = $region49
    $region48: #{tpu_custom_call.1} parent=1 // pred_region
      %s393 = ssub.s32 256, 256
      %394 = vsyncadd [#allocation4], %s393
      %s395 = sshll.u32 [#allocation10], 4
      %s396 = int_to_ptr.vmem [resolvable:$true] %s395
      %401 = dma.vmem_to_hbm [thread:$0]  %s396, 256, %s7, [#allocation4], 128, 128, 8
    $region49: #{tpu_custom_call.1} parent=1 // pred_fallthru
      _
    // Predicated region
    $region50: #{tpu_custom_call.1} parent=1 // pred_check
      _
    $region51: #{tpu_custom_call.1} parent=1 // pred_check_branch
      %403 = sbr.rel (0) target = $region53
    $region52: #{tpu_custom_call.1} parent=1 // pred_region
      %404 = dma.done [#allocation4], 256
    $region53: #{tpu_custom_call.1} parent=1 // pred_fallthru
      _
    %405 = vsyncpa [#allocation3], 1
    %406 = vsyncpa [#allocation6], 1
    %407 = vsyncpa [#allocation9], 1
    %408 = vsyncpa [#allocation4], 1

</llo_original>
